<compile_context>
chip_gen: v7x
topology: tpu7x:2x2x1
jax: 0.10.0
libtpu: 0.0.40
codegen_flags: <defaults>
</compile_context>

<pallas_src>
import functools

import jax
import jax.numpy as jnp
import numpy as np
from jax.experimental import pallas as pl
from jax.experimental.pallas import tpu as pltpu

INPUT_CHANNELS = 1
OUTPUT_CHANNELS = 51
PAD_OUT = 128   # classifier padded to a full lane width (zeros beyond OUTPUT_CHANNELS)


# --------------------------------------------------------------------------- #
# Parameter packing: one bf16 weight buffer (lane-dense) + one tiny f32 buffer.
# --------------------------------------------------------------------------- #
def _check_hidden(hidden):
    assert hidden % 16 == 0 and 2 * hidden <= 128, (
        "this packing supports hidden_channels in {16,32,48,64}; "
        "for H > 64 stack W2/W3 vertically (see TODO)")


def _wpk_rows(hidden):
    rows = 3 * hidden                     # [W2_rel;W2_root] / [W3_rel;W3_root] / WL
    return ((rows + 15) // 16) * 16       # 16-row alignment (bf16 sublane tile)


def pack_weights(params, hidden):
    """bf16 (WROWS, 128): W2|W3 side-by-side in lanes, WL (padded to 128) below."""
    _check_hidden(hidden)
    (_, _, _, w2r, w2s, _, w3r, w3s, _, wl, _) = [np.asarray(p, np.float32) for p in params]
    H = hidden
    buf = np.zeros((_wpk_rows(H), PAD_OUT), np.float32)
    buf[0:H,       0:H]     = w2r          # conv2 lin_rel
    buf[H:2 * H,   0:H]     = w2s          # conv2 lin_root
    buf[0:H,       H:2 * H] = w3r          # conv3 lin_rel
    buf[H:2 * H,   H:2 * H] = w3s          # conv3 lin_root
    buf[2 * H:3 * H, 0:OUTPUT_CHANNELS] = wl
    return jnp.asarray(buf, jnp.bfloat16)


def pack_biases(params, hidden):
    """f32 (8, 128): row0 w1r, row1 w1s, row2 b1, row3 b2, row4 b3, row5 bl."""
    _check_hidden(hidden)
    (w1r, w1s, b1, _, _, b2, _, _, b3, _, bl) = [np.asarray(p, np.float32) for p in params]
    H = hidden
    buf = np.zeros((8, PAD_OUT), np.float32)
    buf[0, :H] = w1r.reshape(-1)
    buf[1, :H] = w1s.reshape(-1)
    buf[2, :H] = b1.reshape(-1)
    buf[3, :H] = b2.reshape(-1)
    buf[4, :H] = b3.reshape(-1)
    buf[5, :OUTPUT_CHANNELS] = bl.reshape(-1)
    return jnp.asarray(buf)


# --------------------------------------------------------------------------- #
# Kernel (one grid step == one graph batch; params resident across the grid)
# --------------------------------------------------------------------------- #
def gnn_kernel(adj_ref, pool_ref, x_ref, wpk_ref, bpk_ref, out_ref, *, hidden):
    H = hidden
    bf16, f32 = jnp.bfloat16, jnp.float32

    adj = adj_ref[...]                      # (N, N) bf16, A[dst, src]
    x = x_ref[...]                          # (N, 1) f32
    pool = pool_ref[...]                    # (G, N) f32 (exact 1/|g| weights)

    w1r = bpk_ref[0:1, 0:H]                 # (1, H) f32
    w1s = bpk_ref[1:2, 0:H]
    b1 = bpk_ref[2:3, 0:H]
    b2 = bpk_ref[3:4, 0:H]
    b3 = bpk_ref[4:5, 0:H]
    bl = bpk_ref[5:6, :]                    # (1, PAD_OUT) f32

    # ---- layer 1 (C_in == 1), reassociated ---------------------------------
    # (adj @ x) @ w1r == adj @ (x * w1r): the C_in=1 projection is a VPU broadcast
    # multiply; the MXU only sees a full-width (N,N)@(N,H) matmul.
    xr = (x * w1r).astype(bf16)                                   # (N, H) bf16
    h = jnp.dot(adj, xr, preferred_element_type=f32) + x * w1s + b1
    h = jnp.maximum(h, 0.0)                                       # (N, H) f32

    # ---- layers 2 / 3: two small matmuls (no sub-128-lane concat/relayout) --
    def conv(h, w_rel, w_root, b):
        hb = h.astype(bf16)
        agg = jnp.dot(adj, hb, preferred_element_type=f32).astype(bf16)   # (N, H)
        return (jnp.dot(agg, w_rel, preferred_element_type=f32)
                + jnp.dot(hb, w_root, preferred_element_type=f32) + b)

    w2r = wpk_ref[0:H, 0:H]                 # bf16, already MXU-ready (no casts)
    w2s = wpk_ref[H:2 * H, 0:H]
    w3r = wpk_ref[0:H, H:2 * H]
    w3s = wpk_ref[H:2 * H, H:2 * H]
    wl = wpk_ref[2 * H:3 * H, :]            # (H, PAD_OUT) bf16

    h = jnp.maximum(conv(h, w2r, w2s, b2), 0.0)
    h = conv(h, w3r, w3s, b3)               # (N, H) f32 (no relu on conv3)

    # ---- global mean pool (f32-exact) + dropout(identity) + classifier -----
    pooled = jnp.dot(pool, h, preferred_element_type=f32)         # (G, H) f32
    out_ref[...] = jnp.dot(pooled, wl.astype(f32),
                           preferred_element_type=f32) + bl       # (G, PAD_OUT) f32


def gnn_forward(adj_bf16, pool_f32, x, wpk, bpk, hidden):
    """adj: (B,N,N) bf16; pool: (B,G,N) f32; x: (B,N,1) f32.
    Returns padded logits (B, G, PAD_OUT); cols >= OUTPUT_CHANNELS are zero."""
    B, N, _ = adj_bf16.shape
    G = pool_f32.shape[1]
    H = hidden
    _check_hidden(H)

    flops_per_batch = (2 * N * N * H * 3          # 3 adjacency matmuls
                       + 2 * N * H * H * 4        # 4 feature matmuls (rel+root x2)
                       + 2 * G * N * H            # mean pool
                       + 2 * G * H * PAD_OUT      # classifier
                       + 8 * N * H)               # broadcasts, biases, relus
    bytes_accessed = (B * (adj_bf16[0].size * 2 + pool_f32[0].size * 4
                           + x[0].size * 4 + G * PAD_OUT * 4)
                      + wpk.size * 2 + bpk.size * 4)

    return pl.pallas_call(
        functools.partial(gnn_kernel, hidden=H),
        out_shape=jax.ShapeDtypeStruct((B, G, PAD_OUT), jnp.float32),
        grid=(B,),
        in_specs=[
            pl.BlockSpec((None, N, N), lambda b: (b, 0, 0)),        # adj   (per batch)
            pl.BlockSpec((None, G, N), lambda b: (b, 0, 0)),        # pool  (per batch)
            pl.BlockSpec((None, N, INPUT_CHANNELS), lambda b: (b, 0, 0)),  # x
            pl.BlockSpec(wpk.shape, lambda b: (0, 0)),              # weights: resident
            pl.BlockSpec(bpk.shape, lambda b: (0, 0)),              # biases:  resident
        ],
        out_specs=pl.BlockSpec((None, G, PAD_OUT), lambda b: (b, 0, 0)),
        compiler_params=pltpu.CompilerParams(
            dimension_semantics=("parallel",)),                     # 2 TCs on v7x
        cost_estimate=pl.CostEstimate(flops=B * flops_per_batch, transcendentals=0,
                                      bytes_accessed=bytes_accessed),
    )(adj_bf16, pool_f32, x, wpk, bpk)


# --------------------------------------------------------------------------- #
# Init + references
# --------------------------------------------------------------------------- #
def init_params(key, hidden):
    """Deterministic synthetic init (uniform, roughly PyTorch Linear scale)."""
    def lin(k, fan_in, fan_out):
        bound = 1.0 / np.sqrt(max(fan_in, 1))
        return jax.random.uniform(k, (fan_in, fan_out), jnp.float32, -bound, bound)

    ks = jax.random.split(key, 11)
    w1r = lin(ks[0], INPUT_CHANNELS, hidden)
    w1s = lin(ks[1], INPUT_CHANNELS, hidden)
    b1 = jax.random.uniform(ks[2], (1, hidden), jnp.float32, -1.0, 1.0)
    w2r = lin(ks[3], hidden, hidden)
    w2s = lin(ks[4], hidden, hidden)
    b2 = jax.random.uniform(ks[5], (1, hidden), jnp.float32,
                            -1.0 / np.sqrt(hidden), 1.0 / np.sqrt(hidden))
    w3r = lin(ks[6], hidden, hidden)
    w3s = lin(ks[7], hidden, hidden)
    b3 = jax.random.uniform(ks[8], (1, hidden), jnp.float32,
                            -1.0 / np.sqrt(hidden), 1.0 / np.sqrt(hidden))
    wl = lin(ks[9], hidden, OUTPUT_CHANNELS)
    bl = jax.random.uniform(ks[10], (1, OUTPUT_CHANNELS), jnp.float32,
                            -1.0 / np.sqrt(hidden), 1.0 / np.sqrt(hidden))
    return (w1r, w1s, b1, w2r, w2s, b2, w3r, w3s, b3, wl, bl)


def reference_forward_f32(adj, pool, x, params):
    """Pure-f32 module semantics (GraphConv x3 + relu + mean pool + Linear)."""
    (w1r, w1s, b1, w2r, w2s, b2, w3r, w3s, b3, wl, bl) = params

    def conv(h, wr, ws, b):
        return (adj @ h) @ wr + b + h @ ws

    h = jnp.maximum(conv(x, w1r, w1s, b1), 0.0)
    h = jnp.maximum(conv(h, w2r, w2s, b2), 0.0)
    h = conv(h, w3r, w3s, b3)
    return (pool @ h) @ wl + bl


def reference_forward_matched(adj_bf16, pool_f32, x, params):
    """Same math as the kernel (bf16 matmul operands / bf16 weights, f32 acc,
    f32 pooling), in plain JAX."""
    bf16, f32 = jnp.bfloat16, jnp.float32
    (w1r, w1s, b1, w2r, w2s, b2, w3r, w3s, b3, wl, bl) = params
    adj = adj_bf16

    xr = (x * w1r).astype(bf16)
    h = jnp.dot(adj, xr, preferred_element_type=f32) + x * w1s + b1
    h = jnp.maximum(h, 0.0)

    def conv(h, wr, ws, b):
        hb = h.astype(bf16)
        agg = jnp.dot(adj, hb, preferred_element_type=f32).astype(bf16)
        return (jnp.dot(agg, wr.astype(bf16), preferred_element_type=f32)
                + jnp.dot(hb, ws.astype(bf16), preferred_element_type=f32) + b)

    h = jnp.maximum(conv(h, w2r, w2s, b2), 0.0)
    h = conv(h, w3r, w3s, b3)
    pooled = jnp.dot(pool_f32, h, preferred_element_type=f32)
    return jnp.dot(pooled, wl.astype(bf16).astype(f32),
                   preferred_element_type=f32) + bl


# --------------------------------------------------------------------------- #
# Main
# --------------------------------------------------------------------------- #
if __name__ == "__main__":
    key = jax.random.PRNGKey(0)
    B = 4           # graph batches sharing the same weights (leading grid axis)
    N = 32          # total nodes per graph batch
    E = 64          # directed edges per graph batch
    G = 2           # graphs per batch (pool groups)
    HIDDEN = 32     # hidden_channels

    k_src, k_dst, k_x, k_params = jax.random.split(key, 4)

    # Synthetic graphs: edge_index (2, E) per batch, edge_weight=None (-> 1.0)
    src = jax.random.randint(k_src, (B, E), 0, N)
    dst = jax.random.randint(k_dst, (B, E), 0, N)

    def build_adj(s, d):
        return jnp.zeros((N, N), jnp.float32).at[d, s].add(1.0)   # A[i, j]: edge j -> i

    adj_f32 = jax.vmap(build_adj)(src, dst)                       # (B, N, N)

    # Node-to-graph assignment (sorted, like PyG data.batch) -> mean-pool matrix (f32)
    batch_vec = jnp.concatenate([jnp.zeros((N // 2,), jnp.int32),
                                 jnp.ones((N - N // 2,), jnp.int32)])
    onehot = (batch_vec[None, :] == jnp.arange(G)[:, None]).astype(jnp.float32)
    counts = jnp.maximum(onehot.sum(axis=1, keepdims=True), 1.0)
    pool_f32 = jnp.broadcast_to(onehot / counts, (B, G, N))       # (B, G, N)

    # Node features (B, N, INPUT_CHANNELS)
    x = jax.random.normal(k_x, (B, N, INPUT_CHANNELS), jnp.float32)

    params = init_params(k_params, HIDDEN)
    wpk = pack_weights(params, HIDDEN)       # bf16, lane-dense
    bpk = pack_biases(params, HIDDEN)        # f32, 8x128

    # adj entries are small integer multiplicities -> exact in bf16
    adj_bf16 = adj_f32.astype(jnp.bfloat16)

    out = jax.block_until_ready(gnn_forward(adj_bf16, pool_f32, x, wpk, bpk, HIDDEN))
    assert out.shape == (B, G, PAD_OUT)
    logits = np.asarray(out[..., :OUTPUT_CHANNELS])

    ref_f32 = np.asarray(jax.block_until_ready(jax.vmap(
        lambda a, p, xx: reference_forward_f32(a, p, xx, params))(adj_f32, pool_f32, x)))
    ref_matched = np.asarray(jax.block_until_ready(jax.vmap(
        lambda a, p, xx: reference_forward_matched(a, p, xx, params))(adj_bf16, pool_f32, x)))

    # 1) Kernel plumbing exact vs. a numerics-matched (bf16-operand) JAX model.
    assert np.allclose(logits, ref_matched, rtol=2e-3, atol=2e-3)
    # 2) Module semantics preserved within bf16 operand-rounding drift (fixed bound).
    assert np.allclose(logits, ref_f32, rtol=5e-2, atol=5e-2)

    print("KERNEL_OK")
</pallas_src>

<mosaic_0001>
module attributes {stable_mosaic.version = 11 : i64} {
  func.func @gnn_kernel(%arg0: i32, %arg1: memref<1x32x32xbf16, #tpu.memory_space<vmem>>, %arg2: memref<1x2x32xf32, #tpu.memory_space<vmem>>, %arg3: memref<1x32x1xf32, #tpu.memory_space<vmem>>, %arg4: memref<96x128xbf16, #tpu.memory_space<vmem>>, %arg5: memref<8x128xf32, #tpu.memory_space<vmem>>, %arg6: memref<1x2x128xf32, #tpu.memory_space<vmem>>) attributes {dimension_semantics = [#tpu.dimension_semantics<parallel>], iteration_bounds = array<i64: 4>, scalar_prefetch = 0 : i64, scratch_operands = 0 : i64, tpu.core_type = #tpu.core_type<tc>, window_params = [{transform_indices = @transform_0, window_bounds = array<i64: 1, 32, 32>}, {transform_indices = @transform_1, window_bounds = array<i64: 1, 2, 32>}, {transform_indices = @transform_2, window_bounds = array<i64: 1, 32, 1>}, {pipeline_mode = #tpu.pipeline_mode<synchronous>, transform_indices = @transform_3, window_bounds = array<i64: 96, 128>}, {pipeline_mode = #tpu.pipeline_mode<synchronous>, transform_indices = @transform_4, window_bounds = array<i64: 8, 128>}, {transform_indices = @transform_5, window_bounds = array<i64: 1, 2, 128>}]} {
    %c0 = arith.constant 0 : index
    %c0_0 = arith.constant 0 : index
    %c0_1 = arith.constant 0 : index
    %0 = vector.load %arg1[%c0, %c0_0, %c0_1] : memref<1x32x32xbf16, #tpu.memory_space<vmem>>, vector<1x32x32xbf16>
    %1 = vector.shape_cast %0 : vector<1x32x32xbf16> to vector<32x32xbf16>
    %c0_2 = arith.constant 0 : index
    %c0_3 = arith.constant 0 : index
    %c0_4 = arith.constant 0 : index
    %2 = vector.load %arg3[%c0_2, %c0_3, %c0_4] : memref<1x32x1xf32, #tpu.memory_space<vmem>>, vector<1x32x1xf32>
    %3 = vector.shape_cast %2 : vector<1x32x1xf32> to vector<32x1xf32>
    %c0_5 = arith.constant 0 : index
    %c0_6 = arith.constant 0 : index
    %c0_7 = arith.constant 0 : index
    %4 = vector.load %arg2[%c0_5, %c0_6, %c0_7] : memref<1x2x32xf32, #tpu.memory_space<vmem>>, vector<1x2x32xf32>
    %5 = vector.shape_cast %4 : vector<1x2x32xf32> to vector<2x32xf32>
    %c0_8 = arith.constant 0 : index
    %c0_9 = arith.constant 0 : index
    %6 = vector.load %arg5[%c0_8, %c0_9] : memref<8x128xf32, #tpu.memory_space<vmem>>, vector<1x32xf32>
    %c1 = arith.constant 1 : index
    %c0_10 = arith.constant 0 : index
    %7 = vector.load %arg5[%c1, %c0_10] : memref<8x128xf32, #tpu.memory_space<vmem>>, vector<1x32xf32>
    %c2 = arith.constant 2 : index
    %c0_11 = arith.constant 0 : index
    %8 = vector.load %arg5[%c2, %c0_11] : memref<8x128xf32, #tpu.memory_space<vmem>>, vector<1x32xf32>
    %c3 = arith.constant 3 : index
    %c0_12 = arith.constant 0 : index
    %9 = vector.load %arg5[%c3, %c0_12] : memref<8x128xf32, #tpu.memory_space<vmem>>, vector<1x32xf32>
    %c4 = arith.constant 4 : index
    %c0_13 = arith.constant 0 : index
    %10 = vector.load %arg5[%c4, %c0_13] : memref<8x128xf32, #tpu.memory_space<vmem>>, vector<1x32xf32>
    %c5 = arith.constant 5 : index
    %c0_14 = arith.constant 0 : index
    %11 = vector.load %arg5[%c5, %c0_14] : memref<8x128xf32, #tpu.memory_space<vmem>>, vector<1x128xf32>
    %12 = vector.broadcast %3 : vector<32x1xf32> to vector<32x32xf32>
    %13 = vector.broadcast %6 : vector<1x32xf32> to vector<32x32xf32>
    %14 = arith.mulf %12, %13 : vector<32x32xf32>
    %15 = arith.truncf %14 : vector<32x32xf32> to vector<32x32xbf16>
    %cst = arith.constant dense<0.000000e+00> : vector<32x32xf32>
    %16 = tpu.matmul %1, %15, %cst {dimension_numbers = #tpu.dot_dimension_numbers<[1], [0], [0], [1], [0, 0, 1, 1], [], []>} : vector<32x32xbf16>, vector<32x32xbf16>, vector<32x32xf32> -> vector<32x32xf32>
    %17 = vector.broadcast %3 : vector<32x1xf32> to vector<32x32xf32>
    %18 = vector.broadcast %7 : vector<1x32xf32> to vector<32x32xf32>
    %19 = arith.mulf %17, %18 : vector<32x32xf32>
    %20 = arith.addf %16, %19 : vector<32x32xf32>
    %21 = vector.broadcast %8 : vector<1x32xf32> to vector<32x32xf32>
    %22 = arith.addf %20, %21 : vector<32x32xf32>
    %cst_15 = arith.constant 0.000000e+00 : f32
    %23 = vector.broadcast %cst_15 : f32 to vector<32x32xf32>
    %24 = arith.maximumf %22, %23 : vector<32x32xf32>
    %c0_16 = arith.constant 0 : index
    %c0_17 = arith.constant 0 : index
    %25 = vector.load %arg4[%c0_16, %c0_17] : memref<96x128xbf16, #tpu.memory_space<vmem>>, vector<32x32xbf16>
    %c32 = arith.constant 32 : index
    %c0_18 = arith.constant 0 : index
    %26 = vector.load %arg4[%c32, %c0_18] : memref<96x128xbf16, #tpu.memory_space<vmem>>, vector<32x32xbf16>
    %c0_19 = arith.constant 0 : index
    %c32_20 = arith.constant 32 : index
    %27 = vector.load %arg4[%c0_19, %c32_20] : memref<96x128xbf16, #tpu.memory_space<vmem>>, vector<32x32xbf16>
    %c32_21 = arith.constant 32 : index
    %c32_22 = arith.constant 32 : index
    %28 = vector.load %arg4[%c32_21, %c32_22] : memref<96x128xbf16, #tpu.memory_space<vmem>>, vector<32x32xbf16>
    %c64 = arith.constant 64 : index
    %c0_23 = arith.constant 0 : index
    %29 = vector.load %arg4[%c64, %c0_23] : memref<96x128xbf16, #tpu.memory_space<vmem>>, vector<32x128xbf16>
    %30 = arith.truncf %24 : vector<32x32xf32> to vector<32x32xbf16>
    %cst_24 = arith.constant dense<0.000000e+00> : vector<32x32xf32>
    %31 = tpu.matmul %1, %30, %cst_24 {dimension_numbers = #tpu.dot_dimension_numbers<[1], [0], [0], [1], [0, 0, 1, 1], [], []>} : vector<32x32xbf16>, vector<32x32xbf16>, vector<32x32xf32> -> vector<32x32xf32>
    %32 = arith.truncf %31 : vector<32x32xf32> to vector<32x32xbf16>
    %cst_25 = arith.constant dense<0.000000e+00> : vector<32x32xf32>
    %33 = tpu.matmul %32, %25, %cst_25 {dimension_numbers = #tpu.dot_dimension_numbers<[1], [0], [0], [1], [0, 0, 1, 1], [], []>} : vector<32x32xbf16>, vector<32x32xbf16>, vector<32x32xf32> -> vector<32x32xf32>
    %cst_26 = arith.constant dense<0.000000e+00> : vector<32x32xf32>
    %34 = tpu.matmul %30, %26, %cst_26 {dimension_numbers = #tpu.dot_dimension_numbers<[1], [0], [0], [1], [0, 0, 1, 1], [], []>} : vector<32x32xbf16>, vector<32x32xbf16>, vector<32x32xf32> -> vector<32x32xf32>
    %35 = arith.addf %33, %34 : vector<32x32xf32>
    %36 = vector.broadcast %9 : vector<1x32xf32> to vector<32x32xf32>
    %37 = arith.addf %35, %36 : vector<32x32xf32>
    %cst_27 = arith.constant 0.000000e+00 : f32
    %38 = vector.broadcast %cst_27 : f32 to vector<32x32xf32>
    %39 = arith.maximumf %37, %38 : vector<32x32xf32>
    %40 = arith.truncf %39 : vector<32x32xf32> to vector<32x32xbf16>
    %cst_28 = arith.constant dense<0.000000e+00> : vector<32x32xf32>
    %41 = tpu.matmul %1, %40, %cst_28 {dimension_numbers = #tpu.dot_dimension_numbers<[1], [0], [0], [1], [0, 0, 1, 1], [], []>} : vector<32x32xbf16>, vector<32x32xbf16>, vector<32x32xf32> -> vector<32x32xf32>
    %42 = arith.truncf %41 : vector<32x32xf32> to vector<32x32xbf16>
    %cst_29 = arith.constant dense<0.000000e+00> : vector<32x32xf32>
    %43 = tpu.matmul %42, %27, %cst_29 {dimension_numbers = #tpu.dot_dimension_numbers<[1], [0], [0], [1], [0, 0, 1, 1], [], []>} : vector<32x32xbf16>, vector<32x32xbf16>, vector<32x32xf32> -> vector<32x32xf32>
    %cst_30 = arith.constant dense<0.000000e+00> : vector<32x32xf32>
    %44 = tpu.matmul %40, %28, %cst_30 {dimension_numbers = #tpu.dot_dimension_numbers<[1], [0], [0], [1], [0, 0, 1, 1], [], []>} : vector<32x32xbf16>, vector<32x32xbf16>, vector<32x32xf32> -> vector<32x32xf32>
    %45 = arith.addf %43, %44 : vector<32x32xf32>
    %46 = vector.broadcast %10 : vector<1x32xf32> to vector<32x32xf32>
    %47 = arith.addf %45, %46 : vector<32x32xf32>
    %cst_31 = arith.constant dense<0.000000e+00> : vector<2x32xf32>
    %48 = tpu.matmul %5, %47, %cst_31 {dimension_numbers = #tpu.dot_dimension_numbers<[1], [0], [0], [1], [0, 0, 1, 1], [], []>} : vector<2x32xf32>, vector<32x32xf32>, vector<2x32xf32> -> vector<2x32xf32>
    %49 = arith.extf %29 : vector<32x128xbf16> to vector<32x128xf32>
    %cst_32 = arith.constant dense<0.000000e+00> : vector<2x128xf32>
    %50 = tpu.matmul %48, %49, %cst_32 {dimension_numbers = #tpu.dot_dimension_numbers<[1], [0], [0], [1], [0, 0, 1, 1], [], []>} : vector<2x32xf32>, vector<32x128xf32>, vector<2x128xf32> -> vector<2x128xf32>
    %51 = vector.broadcast %11 : vector<1x128xf32> to vector<2x128xf32>
    %52 = arith.addf %50, %51 : vector<2x128xf32>
    %c0_33 = arith.constant 0 : index
    %c0_34 = arith.constant 0 : index
    %c0_35 = arith.constant 0 : index
    %53 = vector.load %arg6[%c0_33, %c0_34, %c0_35] : memref<1x2x128xf32, #tpu.memory_space<vmem>>, vector<1x2x128xf32>
    %54 = vector.shape_cast %53 : vector<1x2x128xf32> to vector<2x128xf32>
    %55 = vector.shape_cast %52 : vector<2x128xf32> to vector<1x2x128xf32>
    tpu.vector_store %arg6[%c0_33, %c0_34, %c0_35], %55 {strides = array<i32>} : memref<1x2x128xf32, #tpu.memory_space<vmem>>, vector<1x2x128xf32>,
    return
  }
  func.func @transform_0(%arg0: i32) -> (i32, i32, i32) {
    %c0_i32 = arith.constant 0 : i32
    %c0_i32_0 = arith.constant 0 : i32
    %c0_i32_1 = arith.constant 0 : i32
    return %arg0, %c0_i32, %c0_i32_0 : i32, i32, i32
  }
  func.func @transform_1(%arg0: i32) -> (i32, i32, i32) {
    %c0_i32 = arith.constant 0 : i32
    %c0_i32_0 = arith.constant 0 : i32
    %c0_i32_1 = arith.constant 0 : i32
    return %arg0, %c0_i32, %c0_i32_0 : i32, i32, i32
  }
  func.func @transform_2(%arg0: i32) -> (i32, i32, i32) {
    %c0_i32 = arith.constant 0 : i32
    %c0_i32_0 = arith.constant 0 : i32
    %c0_i32_1 = arith.constant 0 : i32
    return %arg0, %c0_i32, %c0_i32_0 : i32, i32, i32
  }
  func.func @transform_3(%arg0: i32) -> (i32, i32) {
    %c0_i32 = arith.constant 0 : i32
    %c0_i32_0 = arith.constant 0 : i32
    %c0_i32_1 = arith.constant 0 : i32
    return %c0_i32, %c0_i32_0 : i32, i32
  }
  func.func @transform_4(%arg0: i32) -> (i32, i32) {
    %c0_i32 = arith.constant 0 : i32
    %c0_i32_0 = arith.constant 0 : i32
    %c0_i32_1 = arith.constant 0 : i32
    return %c0_i32, %c0_i32_0 : i32, i32
  }
  func.func @transform_5(%arg0: i32) -> (i32, i32, i32) {
    %c0_i32 = arith.constant 0 : i32
    %c0_i32_0 = arith.constant 0 : i32
    %c0_i32_1 = arith.constant 0 : i32
    return %arg0, %c0_i32, %c0_i32_0 : i32, i32, i32
  }
}

</mosaic_0001>

<llo_original>
// kernel: tpu_custom_call.1
$region0: #{tpu_custom_call.1}
  #allocation0 [shape = 'u32[]', space=smem, size = 0x4, offset = 0x4, fixed_abs, tag = 'smem constant byte address 0x4 - core index']
  #allocation1 [shape = 'u32[144,128]{1,0:T(1,128)}', space=vmem, size = 0x12000, scoped, tag = 'internal scratch']
  %s0 = inlined_call_operand.vmem [shape: bf16[4,32,32], index: 0, kind: input, shape index: {}]
  %s1 = inlined_call_operand.vmem [shape: f32[4,2,32], index: 1, kind: input, shape index: {}]
  %s2 = inlined_call_operand.vmem [shape: f32[4,32,1], index: 2, kind: input, shape index: {}]
  %s3 = inlined_call_operand.vmem [shape: bf16[96,128], index: 3, kind: input, shape index: {}]
  %s4 = inlined_call_operand.vmem [shape: f32[8,128], index: 4, kind: input, shape index: {}]
  %s5 = inlined_call_operand.hbm [shape: f32[4,2,128], index: 5, kind: output, shape index: {}]
  %s6 = sld [smem:[#allocation0]]
  $region53: #{tpu_custom_call.1} parent=0
    _
  %s8 = ssub.s32 1, %s6
  %s9 = scalar_select 0, %s8, %s6
  $region1: #{tpu_custom_call.1} parent=0
    #allocation2 [shape = 'u8[2048]{0}', space=vmem, size = 0x800, scoped, tag = 'output window, operand 0']
    #allocation3 [shape = 's32[2]{0}', space=sflag, size = 0x8, scoped, tag = 'scoped memory for tpu_custom_call.1']
    %10 = vsyncpa [#allocation3], 0
    %s11 = scalar_lea.sflag [#allocation3], 1
    %12 = vsyncpa %s11, 0
    loop: start=0, step=1, limit=6
    $region2: #{tpu_custom_call.1} parent=1 // loop_pre_header
      _
    $region3: #{tpu_custom_call.1} parent=1 // loop_header
      %s14 = sphi 0, %s18
      %p15 = scmp.ge.s32.totalorder %s14, 6
      %s24 = sphi 0, %s26
      %s27 = sphi 0, %s24
      %s28 = sphi 0, %s27
      %s44 = sphi 0, %s28
      %s50 = sphi 0, %s52
      %s53 = sphi 0, %s50
      %s54 = sphi 0, %s53
      %s70 = sphi 0, %s54
      %s76 = sphi 0, %s78
      %s79 = sphi 0, %s76
      %s80 = sphi 0, %s79
      %s96 = sphi 0, %s80
      %s100 = sphi 0, %s100
      %s102 = sphi 0, %s100
      %s103 = sphi 0, %s102
      %s117 = sphi 0, %s103
      %s121 = sphi 0, %s121
      %s123 = sphi 0, %s121
      %s124 = sphi 0, %s123
      %s138 = sphi 0, %s124
      %s144 = sphi 0, %s146
      %s147 = sphi 0, %s144
      %s148 = sphi 0, %s147
      %s164 = sphi 0, %s148
    $region4: #{tpu_custom_call.1} parent=1 // loop_header_branch
      %17 = sbr.rel (%p15) target = $region8
    $region5: #{tpu_custom_call.1} parent=1 // loop_body
      %s19 = ssub.s32 %s14, 1
      %s20 = ssub.s32 %s14, 2
      %s21 = sadd.s32 %s14, 1
      %s22 = ssub.s32 %s14, %s21
      %p23 = scmp.eq.s32.totalorder %s22, 0
      %s25 = sadd.s32 %s24, 1
      %s26 = scalar_select %p23, %s24, %s25
      %p29 = pneg %p23
      %p30 = scmp.eq.s32.totalorder %s14, 3
      %p31 = por %p29, %p30
      %p32 = scmp.ne.s32.totalorder %s24, %s27
      %p33 = scmp.eq.s32.totalorder %s14, 0
      %p34 = por %p32, %p33
      %p35 = scmp.ne.s32.totalorder %s24, %s27
      %p36 = scmp.eq.s32.totalorder %s19, 3
      %p37 = por %p35, %p36
      %p38 = scmp.ne.s32.totalorder %s27, %s28
      %p39 = scmp.eq.s32.totalorder %s19, 0
      %p40 = por %p38, %p39
      %p41 = scmp.ne.s32.totalorder %s27, %s28
      %p42 = scmp.eq.s32.totalorder %s20, 3
      %p43 = por %p41, %p42
      %p45 = scmp.ne.s32.totalorder %s28, %s44
      %p46 = scmp.eq.s32.totalorder %s20, 0
      %p47 = por %p45, %p46
      %s48 = ssub.s32 %s14, %s21
      %p49 = scmp.eq.s32.totalorder %s48, 0
      %s51 = sadd.s32 %s50, 1
      %s52 = scalar_select %p49, %s50, %s51
      %p55 = pneg %p49
      %p56 = scmp.eq.s32.totalorder %s14, 3
      %p57 = por %p55, %p56
      %p58 = scmp.ne.s32.totalorder %s50, %s53
      %p59 = scmp.eq.s32.totalorder %s14, 0
      %p60 = por %p58, %p59
      %p61 = scmp.ne.s32.totalorder %s50, %s53
      %p62 = scmp.eq.s32.totalorder %s19, 3
      %p63 = por %p61, %p62
      %p64 = scmp.ne.s32.totalorder %s53, %s54
      %p65 = scmp.eq.s32.totalorder %s19, 0
      %p66 = por %p64, %p65
      %p67 = scmp.ne.s32.totalorder %s53, %s54
      %p68 = scmp.eq.s32.totalorder %s20, 3
      %p69 = por %p67, %p68
      %p71 = scmp.ne.s32.totalorder %s54, %s70
      %p72 = scmp.eq.s32.totalorder %s20, 0
      %p73 = por %p71, %p72
      %s74 = ssub.s32 %s14, %s21
      %p75 = scmp.eq.s32.totalorder %s74, 0
      %s77 = sadd.s32 %s76, 1
      %s78 = scalar_select %p75, %s76, %s77
      %p81 = pneg %p75
      %p82 = scmp.eq.s32.totalorder %s14, 3
      %p83 = por %p81, %p82
      %p84 = scmp.ne.s32.totalorder %s76, %s79
      %p85 = scmp.eq.s32.totalorder %s14, 0
      %p86 = por %p84, %p85
      %p87 = scmp.ne.s32.totalorder %s76, %s79
      %p88 = scmp.eq.s32.totalorder %s19, 3
      %p89 = por %p87, %p88
      %p90 = scmp.ne.s32.totalorder %s79, %s80
      %p91 = scmp.eq.s32.totalorder %s19, 0
      %p92 = por %p90, %p91
      %p93 = scmp.ne.s32.totalorder %s79, %s80
      %p94 = scmp.eq.s32.totalorder %s20, 3
      %p95 = por %p93, %p94
      %p97 = scmp.ne.s32.totalorder %s80, %s96
      %p98 = scmp.eq.s32.totalorder %s20, 0
      %p99 = por %p97, %p98
      %s101 = sadd.s32 %s100, 1
      %p104 = scmp.eq.s32.totalorder %s14, 3
      %p105 = scmp.ne.s32.totalorder %s100, %s102
      %p106 = scmp.eq.s32.totalorder %s14, 0
      %p107 = por %p105, %p106
      %p108 = scmp.ne.s32.totalorder %s100, %s102
      %p109 = scmp.eq.s32.totalorder %s19, 3
      %p110 = por %p108, %p109
      %p111 = scmp.ne.s32.totalorder %s102, %s103
      %p112 = scmp.eq.s32.totalorder %s19, 0
      %p113 = por %p111, %p112
      %p114 = scmp.ne.s32.totalorder %s102, %s103
      %p115 = scmp.eq.s32.totalorder %s20, 3
      %p116 = por %p114, %p115
      %p118 = scmp.ne.s32.totalorder %s103, %s117
      %p119 = scmp.eq.s32.totalorder %s20, 0
      %p120 = por %p118, %p119
      %s122 = sadd.s32 %s121, 1
      %p125 = scmp.eq.s32.totalorder %s14, 3
      %p126 = scmp.ne.s32.totalorder %s121, %s123
      %p127 = scmp.eq.s32.totalorder %s14, 0
      %p128 = por %p126, %p127
      %p129 = scmp.ne.s32.totalorder %s121, %s123
      %p130 = scmp.eq.s32.totalorder %s19, 3
      %p131 = por %p129, %p130
      %p132 = scmp.ne.s32.totalorder %s123, %s124
      %p133 = scmp.eq.s32.totalorder %s19, 0
      %p134 = por %p132, %p133
      %p135 = scmp.ne.s32.totalorder %s123, %s124
      %p136 = scmp.eq.s32.totalorder %s20, 3
      %p137 = por %p135, %p136
      %p139 = scmp.ne.s32.totalorder %s124, %s138
      %p140 = scmp.eq.s32.totalorder %s20, 0
      %p141 = por %p139, %p140
      %s142 = ssub.s32 %s14, %s21
      %p143 = scmp.eq.s32.totalorder %s142, 0
      %s145 = sadd.s32 %s144, 1
      %s146 = scalar_select %p143, %s144, %s145
      %p149 = pneg %p143
      %p150 = scmp.eq.s32.totalorder %s14, 3
      %p151 = por %p149, %p150
      %p152 = scmp.ne.s32.totalorder %s144, %s147
      %p153 = scmp.eq.s32.totalorder %s14, 0
      %p154 = por %p152, %p153
      %p155 = scmp.ne.s32.totalorder %s144, %s147
      %p156 = scmp.eq.s32.totalorder %s19, 3
      %p157 = por %p155, %p156
      %p158 = scmp.ne.s32.totalorder %s147, %s148
      %p159 = scmp.eq.s32.totalorder %s19, 0
      %p160 = por %p158, %p159
      %p161 = scmp.ne.s32.totalorder %s147, %s148
      %p162 = scmp.eq.s32.totalorder %s20, 3
      %p163 = por %p161, %p162
      %p165 = scmp.ne.s32.totalorder %s148, %s164
      %p166 = scmp.eq.s32.totalorder %s20, 0
      %p167 = por %p165, %p166
      %p168 = scmp.le.s32.totalorder 1, %s14
      %p169 = scmp.lt.s32.totalorder %s14, 5
      %p170 = pnand %p168, %p169
      %p171 = pneg %p170
      // Predicated region
      $region9: #{tpu_custom_call.1} parent=5 // pred_check
        _
      $region10: #{tpu_custom_call.1} parent=5 // pred_check_branch
        %173 = sbr.rel (%p170) target = $region12
      $region11: #{tpu_custom_call.1} parent=5 // pred_region
        %s174 = ssub.s32 %s14, 1
        // Predicated region
        $region13: #{tpu_custom_call.1} parent=11 // pred_check
          %p175 = pneg %p113
        $region14: #{tpu_custom_call.1} parent=11 // pred_check_branch
          %177 = sbr.rel (%p175) target = $region16
        $region15: #{tpu_custom_call.1} parent=11 // pred_region
          _
        $region16: #{tpu_custom_call.1} parent=11 // pred_fallthru
          _
        // Predicated region
        $region17: #{tpu_custom_call.1} parent=11 // pred_check
          %p178 = pneg %p134
        $region18: #{tpu_custom_call.1} parent=11 // pred_check_branch
          %180 = sbr.rel (%p178) target = $region20
        $region19: #{tpu_custom_call.1} parent=11 // pred_region
          _
        $region20: #{tpu_custom_call.1} parent=11 // pred_fallthru
          _
      $region12: #{tpu_custom_call.1} parent=5 // pred_fallthru
        _
      %p181 = scmp.lt.s32.totalorder %s14, 4
      // Predicated region
      $region21: #{tpu_custom_call.1} parent=5 // pred_check
        %p182 = pneg %p181
      $region22: #{tpu_custom_call.1} parent=5 // pred_check_branch
        %184 = sbr.rel (%p182) target = $region24
      $region23: #{tpu_custom_call.1} parent=5 // pred_region
        // Predicated region
        $region25: #{tpu_custom_call.1} parent=23 // pred_check
          %p185 = pneg %p34
        $region26: #{tpu_custom_call.1} parent=23 // pred_check_branch
          %187 = sbr.rel (%p185) target = $region28
        $region27: #{tpu_custom_call.1} parent=23 // pred_region
          %p188 = scmp.lt.s32.totalorder %s14, 3
          %s189 = scalar_select %p188, %s14, 3
          %s190 = smul.addr %s189, 4
          %s191 = smul.addr %s190, 4
          %s192 = scalar_lea.vmem %s0, %s191
        $region28: #{tpu_custom_call.1} parent=23 // pred_fallthru
          _
        // Predicated region
        $region29: #{tpu_custom_call.1} parent=23 // pred_check
          %p193 = pneg %p60
        $region30: #{tpu_custom_call.1} parent=23 // pred_check_branch
          %195 = sbr.rel (%p193) target = $region32
        $region31: #{tpu_custom_call.1} parent=23 // pred_region
          %p196 = scmp.lt.s32.totalorder %s14, 3
          %s197 = scalar_select %p196, %s14, 3
          %s198 = smul.addr %s197, 2
          %s199 = scalar_lea.vmem %s1, %s198
        $region32: #{tpu_custom_call.1} parent=23 // pred_fallthru
          _
        // Predicated region
        $region33: #{tpu_custom_call.1} parent=23 // pred_check
          %p200 = pneg %p86
        $region34: #{tpu_custom_call.1} parent=23 // pred_check_branch
          %202 = sbr.rel (%p200) target = $region36
        $region35: #{tpu_custom_call.1} parent=23 // pred_region
          %p203 = scmp.lt.s32.totalorder %s14, 3
          %s204 = scalar_select %p203, %s14, 3
          %s205 = smul.addr %s204, 4
          %s206 = smul.addr %s205, 8
          %s207 = scalar_lea.vmem %s2, %s206
        $region36: #{tpu_custom_call.1} parent=23 // pred_fallthru
          _
      $region24: #{tpu_custom_call.1} parent=5 // pred_fallthru
        _
      %p208 = scmp.le.s32.totalorder 1, %s14
      %p209 = scmp.lt.s32.totalorder %s14, 5
      %p210 = pnand %p208, %p209
      %p211 = pneg %p210
      // Predicated region
      $region37: #{tpu_custom_call.1} parent=5 // pred_check
        _
      $region38: #{tpu_custom_call.1} parent=5 // pred_check_branch
        %213 = sbr.rel (%p210) target = $region40
      $region39: #{tpu_custom_call.1} parent=5 // pred_region
        %s214 = ssub.s32 %s14, 1
        %p215 = scmp.lt.s32.totalorder %s19, 3
        %s216 = scalar_select %p215, %s19, 3
        %s217 = smul.addr %s216, 4
        %s218 = smul.addr %s217, 4
        %s219 = scalar_lea.vmem %s0, %s218
        %p220 = pneg %p40
        %p221 = pneg %p37
        %p222 = scmp.lt.s32.totalorder %s19, 3
        %s223 = scalar_select %p222, %s19, 3
        %s224 = smul.addr %s223, 2
        %s225 = scalar_lea.vmem %s1, %s224
        %p226 = pneg %p66
        %p227 = pneg %p63
        %p228 = scmp.lt.s32.totalorder %s19, 3
        %s229 = scalar_select %p228, %s19, 3
        %s230 = smul.addr %s229, 4
        %s231 = smul.addr %s230, 8
        %s232 = scalar_lea.vmem %s2, %s231
        %p233 = pneg %p92
        %p234 = pneg %p89
        %p235 = pneg %p113
        %p236 = pneg %p110
        %p237 = pneg %p134
        %p238 = pneg %p131
        %p239 = pneg %p160
        %p240 = pneg %p157
        %s241 = sand.u32 %s147, 1
        %s242 = scalar_lea.sflag [#allocation3], %s241
        %s243 = sand.u32 %s147, 1
        %s244 = smul.addr %s243, 2
        %s245 = scalar_lea.vmem [#allocation2], %s244
        %p246 = scmp.lt.s32.totalorder %s19, 3
        %s247 = scalar_select %p246, %s19, 3
        %s248 = smul.addr %s247, 4
        %s249 = smul.addr %s248, 4
        %s250 = scalar_lea.vmem %s0, %s249
        %p251 = scmp.lt.s32.totalorder %s19, 3
        %s252 = scalar_select %p251, %s19, 3
        %s253 = smul.addr %s252, 2
        %s254 = scalar_lea.vmem %s1, %s253
        %p255 = scmp.lt.s32.totalorder %s19, 3
        %s256 = scalar_select %p255, %s19, 3
        %s257 = smul.addr %s256, 4
        %s258 = smul.addr %s257, 8
        %s259 = scalar_lea.vmem %s2, %s258
        %v261 = vld [vmem:[%s250] sm:$0xf]
        %v262 = vld [vmem:[%s250 + $0x4] sm:$0xf]
        %v263 = vld [vmem:[%s250 + $0x8] sm:$0xf]
        %v264 = vld [vmem:[%s250 + $0xc] sm:$0xf]
        %v265 = vld [vmem:[%s259] sm:$0xff]
        %v266 = vld [vmem:[%s259 + $0x8] sm:$0xff]
        %v267 = vld [vmem:[%s259 + $0x10] sm:$0xff]
        %v268 = vld [vmem:[%s259 + $0x18] sm:$0xff]
        %v269 = vld [vmem:[%s254] sm:$0x3]
        %v270 = vld [vmem:[%s4] sm:$0x1]
        %v271 = vld [vmem:[%s4 + $0x1] sm:$0x1]
        %v272 = vld [vmem:[%s4 + $0x2] sm:$0x1]
        %v273 = vld [vmem:[%s4 + $0x3] sm:$0x1]
        %v274 = vld [vmem:[%s4 + $0x4] sm:$0x1]
        %v275 = vld [vmem:[%s4 + $0x5] sm:$0x1]
        %277 = vset.pattern.permute.xlu0 0
        %278 = vperm.xlu0 %277, %v265
        %v279 = vpop.permute.xlu0 %278
        %282 = vset.pattern.permute.xlu0 0
        %283 = vperm.xlu0 %282, %v266
        %v284 = vpop.permute.xlu0 %283
        %287 = vset.pattern.permute.xlu0 0
        %288 = vperm.xlu0 %287, %v267
        %v289 = vpop.permute.xlu0 %288
        %292 = vset.pattern.permute.xlu0 0
        %293 = vperm.xlu0 %292, %v268
        %v294 = vpop.permute.xlu0 %293
        %v296 = vlaneseq
        %v297 = vshrl.u32 %v296, 7
        %v298 = vsub.s32 0, %v297
        %v299 = vrot.slane %v270, %v298
        %v300 = vmul.f32 %v279, %v299
        %v301 = vmul.f32 %v284, %v299
        %v302 = vmul.f32 %v289, %v299
        %v303 = vmul.f32 %v294, %v299
        %v304 = vpack.c.bf16 %v301, %v300
        %v305 = vpack.c.bf16 %v303, %v302
        %v306 = vlaneseq
        %v307 = vshrl.u32 %v306, 7
        %v308 = vsub.s32 0, %v307
        %v309 = vrot.slane %v271, %v308
        %v310 = vmul.f32 %v279, %v309
        %v311 = vmul.f32 %v284, %v309
        %v312 = vmul.f32 %v289, %v309
        %v313 = vmul.f32 %v294, %v309
        %v318 = vunpack.c.l.b16 %v261
        %v319 = vunpack.c.l.b16 %v262
        %v320 = vunpack.c.l.b16 %v263
        %v321 = vunpack.c.l.b16 %v264
        %v322 = vpack.c.b16 %v319, %v318
        %v323 = vpack.c.b16 %v321, %v320
        %vm324 = vcmask 261120
        %v326 = vsel %vm324, %v322, 0
        %v329 = vsel %vm324, %v323, 0
        %331 = vmatprep.subr.bf16.mxu0 0
        %332 = vmatpush1.bf16.msra.mxu0 %v304
        %333 = vmatprep.subr.bf16.mxu0 0
        %334 = vmatpush1.bf16.msra.mxu0 %v305
        %335 = vmatprep.subr.bf16.mxu0 0
        %336 = vmatpush1.bf16.msra.mxu0 0
        %337 = vmatprep.subr.bf16.mxu0 0
        %338 = vmatpush1.bf16.msra.mxu0 0
        %339 = vmatprep.subr.bf16.mxu0 0
        %340 = vmatpush1.bf16.msra.mxu0 0
        %341 = vmatprep.subr.bf16.mxu0 0
        %342 = vmatpush1.bf16.msra.mxu0 0
        %343 = vmatprep.subr.bf16.mxu0 0
        %344 = vmatpush1.bf16.msra.mxu0 0
        %345 = vmatprep.subr.bf16.mxu0 0
        %346 = vmatpush1.bf16.msra.mxu0 0
        %347 = vmatprep.subr.bf16.mxu0 0
        %348 = vmatpush1.bf16.msra.mxu0 0
        %349 = vmatprep.subr.bf16.mxu0 0
        %350 = vmatpush1.bf16.msra.mxu0 0
        %351 = vmatprep.subr.bf16.mxu0 0
        %352 = vmatpush1.bf16.msra.mxu0 0
        %353 = vmatprep.subr.bf16.mxu0 0
        %354 = vmatpush1.bf16.msra.mxu0 0
        %355 = vmatprep.subr.bf16.mxu0 0
        %356 = vmatpush1.bf16.msra.mxu0 0
        %357 = vmatprep.subr.bf16.mxu0 0
        %358 = vmatpush1.bf16.msra.mxu0 0
        %359 = vmatprep.subr.bf16.mxu0 0
        %360 = vmatpush1.bf16.msra.mxu0 0
        %361 = vmatprep.subr.bf16.mxu0 0
        %362 = vmatpush1.bf16.msra.mxu0 0
        %363 = vmatprep.mubr.bf16.mxu0 0
        %364 = vmatmul.mubr.bf16.gmra.mrb[0].mxu0 %v326
        %v365 = vpop.f32.mrb[0].mxu0
        %v366 = vadd.f32 %v310, %v365
        %v367 = vpop.f32.mrb[0].mxu0
        %v368 = vpop.f32.mrb[0].mxu0
        %v369 = vadd.f32 %v311, %v368
        %v370 = vpop.f32.mrb[0].mxu0
        %371 = vmatprep.mubr.bf16.mxu0 0
        %372 = vmatmul.mubr.bf16.gmra.mrb[0].mxu0 %v329
        %v373 = vpop.f32.mrb[0].mxu0
        %v374 = vadd.f32 %v312, %v373
        %v375 = vpop.f32.mrb[0].mxu0
        %v376 = vpop.f32.mrb[0].mxu0
        %v377 = vadd.f32 %v313, %v376
        %v378 = vpop.f32.mrb[0].mxu0
        %379 = vdwg.mxu0
        %v380 = vlaneseq
        %v381 = vshrl.u32 %v380, 7
        %v382 = vsub.s32 0, %v381
        %v383 = vrot.slane %v272, %v382
        %v384 = vadd.f32 %v366, %v383
        %v385 = vadd.f32 %v369, %v383
        %v386 = vadd.f32 %v374, %v383
        %v387 = vadd.f32 %v377, %v383
        %v388 = vmax.f32 %v384, 0.0
        %v389 = vmax.f32 %v385, 0.0
        %v390 = vmax.f32 %v386, 0.0
        %v391 = vmax.f32 %v387, 0.0
        %v392 = vld [vmem:[%s3] sm:$0xf]
        %v393 = vld [vmem:[%s3 + $0x4] sm:$0xf]
        %v394 = vld [vmem:[%s3 + $0x8] sm:$0xf]
        %v395 = vld [vmem:[%s3 + $0xc] sm:$0xf]
        %v396 = vld [vmem:[%s3 + $0x10] sm:$0xf]
        %v397 = vld [vmem:[%s3 + $0x14] sm:$0xf]
        %v398 = vld [vmem:[%s3 + $0x18] sm:$0xf]
        %v399 = vld [vmem:[%s3 + $0x1c] sm:$0xf]
        %v400 = vld [vmem:[%s3 + $0x20] sm:$0xf]
        %v401 = vld [vmem:[%s3 + $0x24] sm:$0xf]
        %v402 = vld [vmem:[%s3 + $0x28] sm:$0xf]
        %v403 = vld [vmem:[%s3 + $0x2c] sm:$0xf]
        %v404 = vpack.c.bf16 %v389, %v388
        %v405 = vpack.c.bf16 %v391, %v390
        %406 = vmatprep.subr.bf16.mxu0 0
        %407 = vmatpush1.bf16.msra.mxu0 %v404
        %408 = vmatprep.subr.bf16.mxu0 0
        %409 = vmatpush1.bf16.msra.mxu0 %v405
        %410 = vmatprep.subr.bf16.mxu0 0
        %411 = vmatpush1.bf16.msra.mxu0 0
        %412 = vmatprep.subr.bf16.mxu0 0
        %413 = vmatpush1.bf16.msra.mxu0 0
        %414 = vmatprep.subr.bf16.mxu0 0
        %415 = vmatpush1.bf16.msra.mxu0 0
        %416 = vmatprep.subr.bf16.mxu0 0
        %417 = vmatpush1.bf16.msra.mxu0 0
        %418 = vmatprep.subr.bf16.mxu0 0
        %419 = vmatpush1.bf16.msra.mxu0 0
        %420 = vmatprep.subr.bf16.mxu0 0
        %421 = vmatpush1.bf16.msra.mxu0 0
        %422 = vmatprep.subr.bf16.mxu0 0
        %423 = vmatpush1.bf16.msra.mxu0 0
        %424 = vmatprep.subr.bf16.mxu0 0
        %425 = vmatpush1.bf16.msra.mxu0 0
        %426 = vmatprep.subr.bf16.mxu0 0
        %427 = vmatpush1.bf16.msra.mxu0 0
        %428 = vmatprep.subr.bf16.mxu0 0
        %429 = vmatpush1.bf16.msra.mxu0 0
        %430 = vmatprep.subr.bf16.mxu0 0
        %431 = vmatpush1.bf16.msra.mxu0 0
        %432 = vmatprep.subr.bf16.mxu0 0
        %433 = vmatpush1.bf16.msra.mxu0 0
        %434 = vmatprep.subr.bf16.mxu0 0
        %435 = vmatpush1.bf16.msra.mxu0 0
        %436 = vmatprep.subr.bf16.mxu0 0
        %437 = vmatpush1.bf16.msra.mxu0 0
        %438 = vmatprep.mubr.bf16.mxu0 0
        %439 = vmatmul.mubr.bf16.gmra.mrb[0].mxu0 %v326
        %v440 = vpop.f32.mrb[0].mxu0
        %v441 = vadd.f32 0.0, %v440
        %v442 = vpop.f32.mrb[0].mxu0
        %v443 = vpop.f32.mrb[0].mxu0
        %v444 = vadd.f32 0.0, %v443
        %v445 = vpop.f32.mrb[0].mxu0
        %446 = vmatprep.mubr.bf16.mxu0 0
        %447 = vmatmul.mubr.bf16.gmra.mrb[0].mxu0 %v329
        %v448 = vpop.f32.mrb[0].mxu0
        %v449 = vadd.f32 0.0, %v448
        %v450 = vpop.f32.mrb[0].mxu0
        %v451 = vpop.f32.mrb[0].mxu0
        %v452 = vadd.f32 0.0, %v451
        %v453 = vpop.f32.mrb[0].mxu0
        %454 = vdwg.mxu0
        %v455 = vpack.c.bf16 %v444, %v441
        %v456 = vpack.c.bf16 %v452, %v449
        %v461 = vunpack.c.l.b16 %v396
        %v462 = vunpack.c.l.b16 %v397
        %v463 = vunpack.c.l.b16 %v398
        %v464 = vunpack.c.l.b16 %v399
        %v465 = vpack.c.b16 %v462, %v461
        %v466 = vpack.c.b16 %v464, %v463
        %v470 = vsel %vm324, %v404, 0
        %v473 = vsel %vm324, %v405, 0
        %475 = vmatprep.subr.bf16.mxu0 0
        %476 = vmatpush1.bf16.msra.mxu0 %v465
        %477 = vmatprep.subr.bf16.mxu0 0
        %478 = vmatpush1.bf16.msra.mxu0 %v466
        %479 = vmatprep.subr.bf16.mxu0 0
        %480 = vmatpush1.bf16.msra.mxu0 0
        %481 = vmatprep.subr.bf16.mxu0 0
        %482 = vmatpush1.bf16.msra.mxu0 0
        %483 = vmatprep.subr.bf16.mxu0 0
        %484 = vmatpush1.bf16.msra.mxu0 0
        %485 = vmatprep.subr.bf16.mxu0 0
        %486 = vmatpush1.bf16.msra.mxu0 0
        %487 = vmatprep.subr.bf16.mxu0 0
        %488 = vmatpush1.bf16.msra.mxu0 0
        %489 = vmatprep.subr.bf16.mxu0 0
        %490 = vmatpush1.bf16.msra.mxu0 0
        %491 = vmatprep.subr.bf16.mxu0 0
        %492 = vmatpush1.bf16.msra.mxu0 0
        %493 = vmatprep.subr.bf16.mxu0 0
        %494 = vmatpush1.bf16.msra.mxu0 0
        %495 = vmatprep.subr.bf16.mxu0 0
        %496 = vmatpush1.bf16.msra.mxu0 0
        %497 = vmatprep.subr.bf16.mxu0 0
        %498 = vmatpush1.bf16.msra.mxu0 0
        %499 = vmatprep.subr.bf16.mxu0 0
        %500 = vmatpush1.bf16.msra.mxu0 0
        %501 = vmatprep.subr.bf16.mxu0 0
        %502 = vmatpush1.bf16.msra.mxu0 0
        %503 = vmatprep.subr.bf16.mxu0 0
        %504 = vmatpush1.bf16.msra.mxu0 0
        %505 = vmatprep.subr.bf16.mxu0 0
        %506 = vmatpush1.bf16.msra.mxu0 0
        %507 = vmatprep.mubr.bf16.mxu0 0
        %508 = vmatmul.mubr.bf16.gmra.mrb[0].mxu0 %v470
        %v509 = vpop.f32.mrb[0].mxu0
        %v510 = vadd.f32 0.0, %v509
        %v511 = vpop.f32.mrb[0].mxu0
        %v512 = vpop.f32.mrb[0].mxu0
        %v513 = vadd.f32 0.0, %v512
        %v514 = vpop.f32.mrb[0].mxu0
        %515 = vmatprep.mubr.bf16.mxu0 0
        %516 = vmatmul.mubr.bf16.gmra.mrb[0].mxu0 %v473
        %v517 = vpop.f32.mrb[0].mxu0
        %v518 = vadd.f32 0.0, %v517
        %v519 = vpop.f32.mrb[0].mxu0
        %v520 = vpop.f32.mrb[0].mxu0
        %v521 = vadd.f32 0.0, %v520
        %v522 = vpop.f32.mrb[0].mxu0
        %523 = vdwg.mxu0
        %v528 = vunpack.c.l.b16 %v392
        %v529 = vunpack.c.l.b16 %v393
        %v530 = vunpack.c.l.b16 %v394
        %v531 = vunpack.c.l.b16 %v395
        %v532 = vpack.c.b16 %v529, %v528
        %v533 = vpack.c.b16 %v531, %v530
        %v537 = vsel %vm324, %v455, 0
        %v540 = vsel %vm324, %v456, 0
        %542 = vmatprep.subr.bf16.mxu0 0
        %543 = vmatpush1.bf16.msra.mxu0 %v532
        %544 = vmatprep.subr.bf16.mxu0 0
        %545 = vmatpush1.bf16.msra.mxu0 %v533
        %546 = vmatprep.subr.bf16.mxu0 0
        %547 = vmatpush1.bf16.msra.mxu0 0
        %548 = vmatprep.subr.bf16.mxu0 0
        %549 = vmatpush1.bf16.msra.mxu0 0
        %550 = vmatprep.subr.bf16.mxu0 0
        %551 = vmatpush1.bf16.msra.mxu0 0
        %552 = vmatprep.subr.bf16.mxu0 0
        %553 = vmatpush1.bf16.msra.mxu0 0
        %554 = vmatprep.subr.bf16.mxu0 0
        %555 = vmatpush1.bf16.msra.mxu0 0
        %556 = vmatprep.subr.bf16.mxu0 0
        %557 = vmatpush1.bf16.msra.mxu0 0
        %558 = vmatprep.subr.bf16.mxu0 0
        %559 = vmatpush1.bf16.msra.mxu0 0
        %560 = vmatprep.subr.bf16.mxu0 0
        %561 = vmatpush1.bf16.msra.mxu0 0
        %562 = vmatprep.subr.bf16.mxu0 0
        %563 = vmatpush1.bf16.msra.mxu0 0
        %564 = vmatprep.subr.bf16.mxu0 0
        %565 = vmatpush1.bf16.msra.mxu0 0
        %566 = vmatprep.subr.bf16.mxu0 0
        %567 = vmatpush1.bf16.msra.mxu0 0
        %568 = vmatprep.subr.bf16.mxu0 0
        %569 = vmatpush1.bf16.msra.mxu0 0
        %570 = vmatprep.subr.bf16.mxu0 0
        %571 = vmatpush1.bf16.msra.mxu0 0
        %572 = vmatprep.subr.bf16.mxu0 0
        %573 = vmatpush1.bf16.msra.mxu0 0
        %574 = vmatprep.mubr.bf16.mxu0 0
        %575 = vmatmul.mubr.bf16.gmra.mrb[0].mxu0 %v537
        %v576 = vpop.f32.mrb[0].mxu0
        %v577 = vadd.f32 %v510, %v576
        %v578 = vpop.f32.mrb[0].mxu0
        %v579 = vpop.f32.mrb[0].mxu0
        %v580 = vadd.f32 %v513, %v579
        %v581 = vpop.f32.mrb[0].mxu0
        %582 = vmatprep.mubr.bf16.mxu0 0
        %583 = vmatmul.mubr.bf16.gmra.mrb[0].mxu0 %v540
        %v584 = vpop.f32.mrb[0].mxu0
        %v585 = vadd.f32 %v518, %v584
        %v586 = vpop.f32.mrb[0].mxu0
        %v587 = vpop.f32.mrb[0].mxu0
        %v588 = vadd.f32 %v521, %v587
        %v589 = vpop.f32.mrb[0].mxu0
        %590 = vdwg.mxu0
        %v591 = vlaneseq
        %v592 = vshrl.u32 %v591, 7
        %v593 = vsub.s32 0, %v592
        %v594 = vrot.slane %v273, %v593
        %v595 = vadd.f32 %v577, %v594
        %v596 = vadd.f32 %v580, %v594
        %v597 = vadd.f32 %v585, %v594
        %v598 = vadd.f32 %v588, %v594
        %v599 = vmax.f32 %v595, 0.0
        %v600 = vmax.f32 %v596, 0.0
        %v601 = vmax.f32 %v597, 0.0
        %v602 = vmax.f32 %v598, 0.0
        %v603 = vpack.c.bf16 %v600, %v599
        %v604 = vpack.c.bf16 %v602, %v601
        %605 = vmatprep.subr.bf16.mxu0 0
        %606 = vmatpush1.bf16.msra.mxu0 %v603
        %607 = vmatprep.subr.bf16.mxu0 0
        %608 = vmatpush1.bf16.msra.mxu0 %v604
        %609 = vmatprep.subr.bf16.mxu0 0
        %610 = vmatpush1.bf16.msra.mxu0 0
        %611 = vmatprep.subr.bf16.mxu0 0
        %612 = vmatpush1.bf16.msra.mxu0 0
        %613 = vmatprep.subr.bf16.mxu0 0
        %614 = vmatpush1.bf16.msra.mxu0 0
        %615 = vmatprep.subr.bf16.mxu0 0
        %616 = vmatpush1.bf16.msra.mxu0 0
        %617 = vmatprep.subr.bf16.mxu0 0
        %618 = vmatpush1.bf16.msra.mxu0 0
        %619 = vmatprep.subr.bf16.mxu0 0
        %620 = vmatpush1.bf16.msra.mxu0 0
        %621 = vmatprep.subr.bf16.mxu0 0
        %622 = vmatpush1.bf16.msra.mxu0 0
        %623 = vmatprep.subr.bf16.mxu0 0
        %624 = vmatpush1.bf16.msra.mxu0 0
        %625 = vmatprep.subr.bf16.mxu0 0
        %626 = vmatpush1.bf16.msra.mxu0 0
        %627 = vmatprep.subr.bf16.mxu0 0
        %628 = vmatpush1.bf16.msra.mxu0 0
        %629 = vmatprep.subr.bf16.mxu0 0
        %630 = vmatpush1.bf16.msra.mxu0 0
        %631 = vmatprep.subr.bf16.mxu0 0
        %632 = vmatpush1.bf16.msra.mxu0 0
        %633 = vmatprep.subr.bf16.mxu0 0
        %634 = vmatpush1.bf16.msra.mxu0 0
        %635 = vmatprep.subr.bf16.mxu0 0
        %636 = vmatpush1.bf16.msra.mxu0 0
        %637 = vmatprep.mubr.bf16.mxu0 0
        %638 = vmatmul.mubr.bf16.gmra.mrb[0].mxu0 %v326
        %v639 = vpop.f32.mrb[0].mxu0
        %v640 = vadd.f32 0.0, %v639
        %v641 = vpop.f32.mrb[0].mxu0
        %v642 = vpop.f32.mrb[0].mxu0
        %v643 = vadd.f32 0.0, %v642
        %v644 = vpop.f32.mrb[0].mxu0
        %645 = vmatprep.mubr.bf16.mxu0 0
        %646 = vmatmul.mubr.bf16.gmra.mrb[0].mxu0 %v329
        %v647 = vpop.f32.mrb[0].mxu0
        %v648 = vadd.f32 0.0, %v647
        %v649 = vpop.f32.mrb[0].mxu0
        %v650 = vpop.f32.mrb[0].mxu0
        %v651 = vadd.f32 0.0, %v650
        %v652 = vpop.f32.mrb[0].mxu0
        %653 = vdwg.mxu0
        %v654 = vpack.c.bf16 %v643, %v640
        %v655 = vpack.c.bf16 %v651, %v648
        %656 = vrot.lane.b32.xlu0 %v465, 96
        %v657 = vpop.permute.xlu0 %656
        %658 = vrot.lane.b32.xlu0 %v466, 96
        %v659 = vpop.permute.xlu0 %658
        %v663 = vsel %vm324, %v603, 0
        %v666 = vsel %vm324, %v604, 0
        %668 = vmatprep.subr.bf16.mxu0 0
        %669 = vmatpush1.bf16.msra.mxu0 %v657
        %670 = vmatprep.subr.bf16.mxu0 0
        %671 = vmatpush1.bf16.msra.mxu0 %v659
        %672 = vmatprep.subr.bf16.mxu0 0
        %673 = vmatpush1.bf16.msra.mxu0 0
        %674 = vmatprep.subr.bf16.mxu0 0
        %675 = vmatpush1.bf16.msra.mxu0 0
        %676 = vmatprep.subr.bf16.mxu0 0
        %677 = vmatpush1.bf16.msra.mxu0 0
        %678 = vmatprep.subr.bf16.mxu0 0
        %679 = vmatpush1.bf16.msra.mxu0 0
        %680 = vmatprep.subr.bf16.mxu0 0
        %681 = vmatpush1.bf16.msra.mxu0 0
        %682 = vmatprep.subr.bf16.mxu0 0
        %683 = vmatpush1.bf16.msra.mxu0 0
        %684 = vmatprep.subr.bf16.mxu0 0
        %685 = vmatpush1.bf16.msra.mxu0 0
        %686 = vmatprep.subr.bf16.mxu0 0
        %687 = vmatpush1.bf16.msra.mxu0 0
        %688 = vmatprep.subr.bf16.mxu0 0
        %689 = vmatpush1.bf16.msra.mxu0 0
        %690 = vmatprep.subr.bf16.mxu0 0
        %691 = vmatpush1.bf16.msra.mxu0 0
        %692 = vmatprep.subr.bf16.mxu0 0
        %693 = vmatpush1.bf16.msra.mxu0 0
        %694 = vmatprep.subr.bf16.mxu0 0
        %695 = vmatpush1.bf16.msra.mxu0 0
        %696 = vmatprep.subr.bf16.mxu0 0
        %697 = vmatpush1.bf16.msra.mxu0 0
        %698 = vmatprep.subr.bf16.mxu0 0
        %699 = vmatpush1.bf16.msra.mxu0 0
        %700 = vmatprep.mubr.bf16.mxu0 0
        %701 = vmatmul.mubr.bf16.gmra.mrb[0].mxu0 %v663
        %v702 = vpop.f32.mrb[0].mxu0
        %v703 = vadd.f32 0.0, %v702
        %v704 = vpop.f32.mrb[0].mxu0
        %v705 = vpop.f32.mrb[0].mxu0
        %v706 = vadd.f32 0.0, %v705
        %v707 = vpop.f32.mrb[0].mxu0
        %708 = vmatprep.mubr.bf16.mxu0 0
        %709 = vmatmul.mubr.bf16.gmra.mrb[0].mxu0 %v666
        %v710 = vpop.f32.mrb[0].mxu0
        %v711 = vadd.f32 0.0, %v710
        %v712 = vpop.f32.mrb[0].mxu0
        %v713 = vpop.f32.mrb[0].mxu0
        %v714 = vadd.f32 0.0, %v713
        %v715 = vpop.f32.mrb[0].mxu0
        %716 = vdwg.mxu0
        %717 = vrot.lane.b32.xlu0 %v532, 96
        %v718 = vpop.permute.xlu0 %717
        %719 = vrot.lane.b32.xlu0 %v533, 96
        %v720 = vpop.permute.xlu0 %719
        %v724 = vsel %vm324, %v654, 0
        %v727 = vsel %vm324, %v655, 0
        %729 = vmatprep.subr.bf16.mxu0 0
        %730 = vmatpush1.bf16.msra.mxu0 %v718
        %731 = vmatprep.subr.bf16.mxu0 0
        %732 = vmatpush1.bf16.msra.mxu0 %v720
        %733 = vmatprep.subr.bf16.mxu0 0
        %734 = vmatpush1.bf16.msra.mxu0 0
        %735 = vmatprep.subr.bf16.mxu0 0
        %736 = vmatpush1.bf16.msra.mxu0 0
        %737 = vmatprep.subr.bf16.mxu0 0
        %738 = vmatpush1.bf16.msra.mxu0 0
        %739 = vmatprep.subr.bf16.mxu0 0
        %740 = vmatpush1.bf16.msra.mxu0 0
        %741 = vmatprep.subr.bf16.mxu0 0
        %742 = vmatpush1.bf16.msra.mxu0 0
        %743 = vmatprep.subr.bf16.mxu0 0
        %744 = vmatpush1.bf16.msra.mxu0 0
        %745 = vmatprep.subr.bf16.mxu0 0
        %746 = vmatpush1.bf16.msra.mxu0 0
        %747 = vmatprep.subr.bf16.mxu0 0
        %748 = vmatpush1.bf16.msra.mxu0 0
        %749 = vmatprep.subr.bf16.mxu0 0
        %750 = vmatpush1.bf16.msra.mxu0 0
        %751 = vmatprep.subr.bf16.mxu0 0
        %752 = vmatpush1.bf16.msra.mxu0 0
        %753 = vmatprep.subr.bf16.mxu0 0
        %754 = vmatpush1.bf16.msra.mxu0 0
        %755 = vmatprep.subr.bf16.mxu0 0
        %756 = vmatpush1.bf16.msra.mxu0 0
        %757 = vmatprep.subr.bf16.mxu0 0
        %758 = vmatpush1.bf16.msra.mxu0 0
        %759 = vmatprep.subr.bf16.mxu0 0
        %760 = vmatpush1.bf16.msra.mxu0 0
        %761 = vmatprep.mubr.bf16.mxu0 0
        %762 = vmatmul.mubr.bf16.gmra.mrb[0].mxu0 %v724
        %v763 = vpop.f32.mrb[0].mxu0
        %v764 = vadd.f32 %v703, %v763
        %v765 = vpop.f32.mrb[0].mxu0
        %v766 = vpop.f32.mrb[0].mxu0
        %v767 = vadd.f32 %v706, %v766
        %v768 = vpop.f32.mrb[0].mxu0
        %769 = vmatprep.mubr.bf16.mxu0 0
        %770 = vmatmul.mubr.bf16.gmra.mrb[0].mxu0 %v727
        %v771 = vpop.f32.mrb[0].mxu0
        %v772 = vadd.f32 %v711, %v771
        %v773 = vpop.f32.mrb[0].mxu0
        %v774 = vpop.f32.mrb[0].mxu0
        %v775 = vadd.f32 %v714, %v774
        %v776 = vpop.f32.mrb[0].mxu0
        %777 = vdwg.mxu0
        %v778 = vlaneseq
        %v779 = vshrl.u32 %v778, 7
        %v780 = vsub.s32 0, %v779
        %v781 = vrot.slane %v274, %v780
        %v782 = vadd.f32 %v764, %v781
        %v783 = vadd.f32 %v767, %v781
        %v784 = vadd.f32 %v772, %v781
        %v785 = vadd.f32 %v775, %v781
        %v787 = vsel %vm324, %v269, 0
        %789 = vmatprep.subr.mxu0 0.0
        %790 = vmatpush1.msra.mxu0 %v782
        %791 = vmatprep.subr.mxu0 0.0
        %792 = vmatpush1.msra.mxu0 %v783
        %793 = vmatprep.subr.mxu0 0.0
        %794 = vmatpush1.msra.mxu0 %v784
        %795 = vmatprep.subr.mxu0 0.0
        %796 = vmatpush1.msra.mxu0 %v785
        %797 = vmatprep.subr.mxu0 0.0
        %798 = vmatpush1.msra.mxu0 0.0
        %799 = vmatprep.subr.mxu0 0.0
        %800 = vmatpush1.msra.mxu0 0.0
        %801 = vmatprep.subr.mxu0 0.0
        %802 = vmatpush1.msra.mxu0 0.0
        %803 = vmatprep.subr.mxu0 0.0
        %804 = vmatpush1.msra.mxu0 0.0
        %805 = vmatprep.subr.mxu0 0.0
        %806 = vmatpush1.msra.mxu0 0.0
        %807 = vmatprep.subr.mxu0 0.0
        %808 = vmatpush1.msra.mxu0 0.0
        %809 = vmatprep.subr.mxu0 0.0
        %810 = vmatpush1.msra.mxu0 0.0
        %811 = vmatprep.subr.mxu0 0.0
        %812 = vmatpush1.msra.mxu0 0.0
        %813 = vmatprep.subr.mxu0 0.0
        %814 = vmatpush1.msra.mxu0 0.0
        %815 = vmatprep.subr.mxu0 0.0
        %816 = vmatpush1.msra.mxu0 0.0
        %817 = vmatprep.subr.mxu0 0.0
        %818 = vmatpush1.msra.mxu0 0.0
        %819 = vmatprep.subr.mxu0 0.0
        %820 = vmatpush1.msra.mxu0 0.0
        %821 = vmatprep.subr.mxu0 0.0
        %822 = vmatpush1.msra.mxu0 0.0
        %823 = vmatprep.subr.mxu0 0.0
        %824 = vmatpush1.msra.mxu0 0.0
        %825 = vmatprep.subr.mxu0 0.0
        %826 = vmatpush1.msra.mxu0 0.0
        %827 = vmatprep.subr.mxu0 0.0
        %828 = vmatpush1.msra.mxu0 0.0
        %829 = vmatprep.subr.mxu0 0.0
        %830 = vmatpush1.msra.mxu0 0.0
        %831 = vmatprep.subr.mxu0 0.0
        %832 = vmatpush1.msra.mxu0 0.0
        %833 = vmatprep.subr.mxu0 0.0
        %834 = vmatpush1.msra.mxu0 0.0
        %835 = vmatprep.subr.mxu0 0.0
        %836 = vmatpush1.msra.mxu0 0.0
        %837 = vmatprep.subr.mxu0 0.0
        %838 = vmatpush1.msra.mxu0 0.0
        %839 = vmatprep.subr.mxu0 0.0
        %840 = vmatpush1.msra.mxu0 0.0
        %841 = vmatprep.subr.mxu0 0.0
        %842 = vmatpush1.msra.mxu0 0.0
        %843 = vmatprep.subr.mxu0 0.0
        %844 = vmatpush1.msra.mxu0 0.0
        %845 = vmatprep.subr.mxu0 0.0
        %846 = vmatpush1.msra.mxu0 0.0
        %847 = vmatprep.subr.mxu0 0.0
        %848 = vmatpush1.msra.mxu0 0.0
        %849 = vmatprep.subr.mxu0 0.0
        %850 = vmatpush1.msra.mxu0 0.0
        %851 = vmatprep.subr.mxu0 0.0
        %852 = vmatpush1.msra.mxu0 0.0
        %853 = vmatprep.mubr.f32.mxu0 0.0
        %854 = vmatmul.mubr.f32.gmra.mrb[0].mxu0 %v787
        %v855 = vpop.f32.mrb[0].mxu0
        %v856 = vadd.f32 0.0, %v855
        %v857 = vpop.f32.mrb[0].mxu0
        %858 = vdwg.mxu0
        %v859 = vunpack.c.l.bf16 %v400
        %v860 = vunpack.c.l.bf16 %v401
        %v861 = vunpack.c.l.bf16 %v402
        %v862 = vunpack.c.l.bf16 %v403
        %v863 = vlaneseq
        %v864 = vshrl.u32 %v863, 7
        %v865 = vsub.s32 0, %v864
        %v866 = vrot.slane %v275, %v865
        %v868 = vsel %vm324, %v856, 0
        %870 = vmatprep.subr.mxu0 0.0
        %871 = vmatpush1.msra.mxu0 %v859
        %872 = vmatprep.subr.mxu0 0.0
        %873 = vmatpush1.msra.mxu0 %v860
        %874 = vmatprep.subr.mxu0 0.0
        %875 = vmatpush1.msra.mxu0 %v861
        %876 = vmatprep.subr.mxu0 0.0
        %877 = vmatpush1.msra.mxu0 %v862
        %878 = vmatprep.subr.mxu0 0.0
        %879 = vmatpush1.msra.mxu0 0.0
        %880 = vmatprep.subr.mxu0 0.0
        %881 = vmatpush1.msra.mxu0 0.0
        %882 = vmatprep.subr.mxu0 0.0
        %883 = vmatpush1.msra.mxu0 0.0
        %884 = vmatprep.subr.mxu0 0.0
        %885 = vmatpush1.msra.mxu0 0.0
        %886 = vmatprep.subr.mxu0 0.0
        %887 = vmatpush1.msra.mxu0 0.0
        %888 = vmatprep.subr.mxu0 0.0
        %889 = vmatpush1.msra.mxu0 0.0
        %890 = vmatprep.subr.mxu0 0.0
        %891 = vmatpush1.msra.mxu0 0.0
        %892 = vmatprep.subr.mxu0 0.0
        %893 = vmatpush1.msra.mxu0 0.0
        %894 = vmatprep.subr.mxu0 0.0
        %895 = vmatpush1.msra.mxu0 0.0
        %896 = vmatprep.subr.mxu0 0.0
        %897 = vmatpush1.msra.mxu0 0.0
        %898 = vmatprep.subr.mxu0 0.0
        %899 = vmatpush1.msra.mxu0 0.0
        %900 = vmatprep.subr.mxu0 0.0
        %901 = vmatpush1.msra.mxu0 0.0
        %902 = vmatprep.subr.mxu0 0.0
        %903 = vmatpush1.msra.mxu0 0.0
        %904 = vmatprep.subr.mxu0 0.0
        %905 = vmatpush1.msra.mxu0 0.0
        %906 = vmatprep.subr.mxu0 0.0
        %907 = vmatpush1.msra.mxu0 0.0
        %908 = vmatprep.subr.mxu0 0.0
        %909 = vmatpush1.msra.mxu0 0.0
        %910 = vmatprep.subr.mxu0 0.0
        %911 = vmatpush1.msra.mxu0 0.0
        %912 = vmatprep.subr.mxu0 0.0
        %913 = vmatpush1.msra.mxu0 0.0
        %914 = vmatprep.subr.mxu0 0.0
        %915 = vmatpush1.msra.mxu0 0.0
        %916 = vmatprep.subr.mxu0 0.0
        %917 = vmatpush1.msra.mxu0 0.0
        %918 = vmatprep.subr.mxu0 0.0
        %919 = vmatpush1.msra.mxu0 0.0
        %920 = vmatprep.subr.mxu0 0.0
        %921 = vmatpush1.msra.mxu0 0.0
        %922 = vmatprep.subr.mxu0 0.0
        %923 = vmatpush1.msra.mxu0 0.0
        %924 = vmatprep.subr.mxu0 0.0
        %925 = vmatpush1.msra.mxu0 0.0
        %926 = vmatprep.subr.mxu0 0.0
        %927 = vmatpush1.msra.mxu0 0.0
        %928 = vmatprep.subr.mxu0 0.0
        %929 = vmatpush1.msra.mxu0 0.0
        %930 = vmatprep.subr.mxu0 0.0
        %931 = vmatpush1.msra.mxu0 0.0
        %932 = vmatprep.subr.mxu0 0.0
        %933 = vmatpush1.msra.mxu0 0.0
        %934 = vmatprep.mubr.f32.mxu0 0.0
        %935 = vmatmul.mubr.f32.gmra.mrb[0].mxu0 %v868
        %v936 = vpop.f32.mrb[0].mxu0
        %v937 = vadd.f32 %v866, %v936
        %v938 = vpop.f32.mrb[0].mxu0
        %939 = vdwg.mxu0
        %940 = vst [vmem:[%s245] sm:$0x3] %v937
        %s941 = sand.u32 %s147, 1
        %s942 = scalar_lea.sflag [#allocation3], %s941
        %s943 = sand.u32 %s147, 1
        %s944 = smul.addr %s943, 2
        %s945 = scalar_lea.vmem [#allocation2], %s944
        // Predicated region
        $region41: #{tpu_custom_call.1} parent=39 // pred_check
          %p946 = pneg %p157
        $region42: #{tpu_custom_call.1} parent=39 // pred_check_branch
          %948 = sbr.rel (%p946) target = $region44
        $region43: #{tpu_custom_call.1} parent=39 // pred_region
          %s950 = ssub.s32 32, 32
          %951 = vsyncadd %s942, %s950
          %s952 = smul.addr %s19, 32
          %s953 = scalar_lea.hbm %s5, %s952
          %s955 = sshll.u32 %s945, 4
          %s956 = int_to_ptr.vmem [resolvable:$true] %s955
          %958 = dma.vmem_to_hbm [thread:$0]  %s956, 32, %s953, %s942
        $region44: #{tpu_custom_call.1} parent=39 // pred_fallthru
          _
      $region40: #{tpu_custom_call.1} parent=5 // pred_fallthru
        _
      %p959 = scmp.le.s32.totalorder 2, %s14
      // Predicated region
      $region45: #{tpu_custom_call.1} parent=5 // pred_check
        %p960 = pneg %p959
      $region46: #{tpu_custom_call.1} parent=5 // pred_check_branch
        %962 = sbr.rel (%p960) target = $region48
      $region47: #{tpu_custom_call.1} parent=5 // pred_region
        %s963 = ssub.s32 %s14, 2
        // Predicated region
        $region49: #{tpu_custom_call.1} parent=47 // pred_check
          %p964 = pneg %p163
        $region50: #{tpu_custom_call.1} parent=47 // pred_check_branch
          %966 = sbr.rel (%p964) target = $region52
        $region51: #{tpu_custom_call.1} parent=47 // pred_region
          %s967 = sand.u32 %s148, 1
          %s968 = scalar_lea.sflag [#allocation3], %s967
          %s969 = sand.u32 %s148, 1
          %s970 = smul.addr %s969, 2
          %s971 = scalar_lea.vmem [#allocation2], %s970
          %972 = dma.done %s968, 32
        $region52: #{tpu_custom_call.1} parent=47 // pred_fallthru
          _
      $region48: #{tpu_custom_call.1} parent=5 // pred_fallthru
        _
    $region6: #{tpu_custom_call.1} parent=1 // loop_footer
      %s18 = sadd.s32 1, %s14
    $region7: #{tpu_custom_call.1} parent=1 // loop_footer_branch
      %13 = sbr.rel target = $region3
    $region8: #{tpu_custom_call.1} parent=1 // loop_exit
      _
    %973 = vsyncpa [#allocation3], 1
    %s974 = scalar_lea.sflag [#allocation3], 1
    %975 = vsyncpa %s974, 1

</llo_original>
